<compile_context>
chip_gen: v7x
topology: tpu7x:2x2x1
jax: 0.10.0
libtpu: 0.0.40
codegen_flags: <defaults>
</compile_context>

<pallas_src>
import functools
import math

import jax
import jax.numpy as jnp
from jax.experimental import pallas as pl
from jax.experimental.pallas import tpu as pltpu


def _tpu_budgets():
    """Per-generation VMEM budget + dual-TensorCore hint."""
    try:
        info = pltpu.get_tpu_info()
        vmem_cap = int(getattr(info, "vmem_capacity_bytes", 0))
    except Exception:
        vmem_cap = 0
    if vmem_cap > 64 * 1024 * 1024:
        # v5e / v6e class: 128 MiB physical VMEM, single TensorCore per chip.
        return {"vmem_limit_bytes": 64 * 1024 * 1024, "dual_core": False}
    # v7x class (64 MiB VMEM per TC, 2 TCs per chip) or unknown: conservative.
    return {"vmem_limit_bytes": 40 * 1024 * 1024, "dual_core": True}


def _act_loss_kernel(zero_ref, one_ref, labels_ref, partial_ref, *,
                     tm, n_valid_rows, need_mask, vreg_partial):
    i = pl.program_id(0)

    # Upcast to f32 in vregs (v5e VPU has no bf16 ALU; keeps accumulation
    # in full precision).  DMA traffic stays in the caller's input dtype.
    labels = labels_ref[...].astype(jnp.float32)
    one = one_ref[...].astype(jnp.float32)
    zero = zero_ref[...].astype(jnp.float32)

    # |one - labels| + |zero - (1 - labels)|   (elementwise, VPU)
    loss = jnp.abs(one - labels) + jnp.abs(zero - (1.0 - labels))

    if need_mask:
        # Zero out rows past the true row count in the ragged last tile
        # (out-of-bounds block contents are unspecified).
        row = jax.lax.broadcasted_iota(jnp.int32, loss.shape, 0) + i * tm
        loss = jnp.where(row < n_valid_rows, loss, 0.0)

    if vreg_partial:
        # Lane-dense (tm, 128) tile: reduce only over the row axis in vreg-
        # shaped (8, 128) groups — pure VPU adds, no cross-lane XLU reduce in
        # the per-step epilogue.  Wrapper sums everything.
        part = jnp.sum(loss.reshape(tm // 8, 8, 128), axis=0)
        partial_ref[...] = part.reshape(1, 8, 128)
    else:
        # Fallback (odd layouts): scalar per-tile total, broadcast into this
        # tile's aligned output block; wrapper reads [:, 0, 0].
        total = jnp.sum(loss)
        partial_ref[...] = jnp.full(partial_ref.shape, total, dtype=jnp.float32)


def activation_loss(zero, one, labels, *, target_block_bytes=None,
                    vmem_limit_bytes=None):
    """Pallas implementation of ActivationLoss.forward(zero, one, labels).

    Caller contract (biggest perf lever): pass `one`/`zero`/`labels` in their
    narrowest natural dtype (bf16, int8, bool, ...).  The kernel upcasts to
    f32 internally; pre-casting to f32 outside would add a full extra HBM pass.
    """
    assert zero.shape == one.shape == labels.shape
    n = labels.shape[0]
    inv_n = 1.0 / float(n)

    total_elems = math.prod(labels.shape)

    # --- Lane-dense layout selection -------------------------------------
    if total_elems % 128 == 0 and total_elems >= 128:
        width = 128
        rows = total_elems // 128
    else:
        # TODO(synk): could pad to a 128 multiple, but that costs an extra
        # HBM pass; full-extent (N, D) blocks stay correct, just lane-masked.
        width = (total_elems // n) if labels.ndim > 1 else 1
        rows = n

    z2 = zero.reshape(rows, width)
    o2 = one.reshape(rows, width)
    l2 = labels.reshape(rows, width)

    # --- Dtype-aware, per-generation tile sizing --------------------------
    itemsizes = [jnp.dtype(a.dtype).itemsize for a in (z2, o2, l2)]
    in_bytes_per_elem = sum(itemsizes)
    # Sub-32-bit dtypes pack along sublanes -> keep row tiles 16/32-aligned.
    row_align = 8 * max(1, 4 // min(itemsizes))

    budgets = _tpu_budgets()
    if vmem_limit_bytes is None:
        vmem_limit_bytes = budgets["vmem_limit_bytes"]

    # Live VMEM per block element: 3 inputs x 2 pipeline buffers (input dtype)
    # plus ~8 f32-sized elementwise temps (Mosaic materializes large
    # intermediates in VMEM), with fixed headroom for outputs / scratch.
    live_bytes_per_elem = 2 * in_bytes_per_elem + 8 * 4
    usable = max(1 << 20, int(vmem_limit_bytes) - (12 << 20))
    elems_budget = usable // live_bytes_per_elem
    if target_block_bytes is not None:
        elems_budget = min(elems_budget,
                           max(1, target_block_bytes // max(itemsizes)))

    rows_budget = max(row_align,
                      (elems_budget // width) // row_align * row_align)
    tm = min(rows, rows_budget)
    # v7x: force >= 2 tiles so the "parallel" grid axis is sharded across both
    # TensorCores (each has its own ~3.2 TB/s HBM path).  Harmless elsewhere.
    if budgets["dual_core"] and tm >= rows and rows > row_align:
        tm = max(row_align, (rows // 2) // row_align * row_align)
    if tm >= rows:
        tm = rows  # single full-extent block: always layout-legal

    num_tiles = int(pl.cdiv(rows, tm))
    need_mask = (rows % tm) != 0
    vreg_partial = (width == 128) and (tm % 8 == 0)

    kernel = functools.partial(_act_loss_kernel, tm=tm, n_valid_rows=rows,
                               need_mask=need_mask, vreg_partial=vreg_partial)

    partials = pl.pallas_call(
        kernel,
        out_shape=jax.ShapeDtypeStruct((num_tiles, 8, 128), jnp.float32),
        grid=(num_tiles,),
        in_specs=[
            pl.BlockSpec((tm, width), lambda i: (i, 0)),
            pl.BlockSpec((tm, width), lambda i: (i, 0)),
            pl.BlockSpec((tm, width), lambda i: (i, 0)),
        ],
        out_specs=pl.BlockSpec((1, 8, 128), lambda i: (i, 0, 0)),
        compiler_params=pltpu.CompilerParams(
            dimension_semantics=("parallel",),   # tiles independent -> v7x 2 TCs
            vmem_limit_bytes=int(vmem_limit_bytes),
        ),
    )(z2, o2, l2)

    # Tiny finalize: sum the per-tile partials and apply 1/N exactly once.
    if vreg_partial:
        return jnp.sum(partials) * inv_n
    return jnp.sum(partials[:, 0, 0]) * inv_n


def activation_loss_ref(zero, one, labels):
    """Pure-JAX reference matching the PyTorch module (f32 arithmetic)."""
    z = zero.astype(jnp.float32)
    o = one.astype(jnp.float32)
    l = labels.astype(jnp.float32)
    loss_act = jnp.abs(o - l) + jnp.abs(z - (1.0 - l))
    return (1.0 / labels.shape[0]) * jnp.sum(loss_act)


def _check(out, ref, tag):
    assert jnp.allclose(out, ref, rtol=1e-4, atol=1e-5), (tag, out, ref)


if __name__ == "__main__":
    key = jax.random.PRNGKey(0)

    # Test 1: small f32, single lane-dense tile, vreg-partial path.
    k0, k1, k2 = jax.random.split(key, 3)
    N, D = 8, 128
    zero = jax.random.uniform(k0, (N, D), dtype=jnp.float32)
    one = jax.random.uniform(k1, (N, D), dtype=jnp.float32)
    labels = (jax.random.uniform(k2, (N, D)) > 0.5).astype(jnp.float32)
    out = jax.block_until_ready(activation_loss(zero, one, labels))
    _check(out, activation_loss_ref(zero, one, labels), "t1")

    # Test 2: bf16 inputs, D=64 -> lane-dense flatten to (15, 128).
    k3, k4, k5 = jax.random.split(jax.random.PRNGKey(1), 3)
    N2, D2 = 30, 64
    zero2 = jax.random.uniform(k3, (N2, D2)).astype(jnp.bfloat16)
    one2 = jax.random.uniform(k4, (N2, D2)).astype(jnp.bfloat16)
    labels2 = (jax.random.uniform(k5, (N2, D2)) > 0.5).astype(jnp.bfloat16)
    out2 = jax.block_until_ready(activation_loss(zero2, one2, labels2))
    _check(out2, activation_loss_ref(zero2, one2, labels2), "t2")

    # Test 3: forced multi-tile + ragged last tile + in-kernel mask.
    k6, k7, k8 = jax.random.split(jax.random.PRNGKey(2), 3)
    N3, D3 = 77, 128
    zero3 = jax.random.uniform(k6, (N3, D3), dtype=jnp.float32)
    one3 = jax.random.uniform(k7, (N3, D3), dtype=jnp.float32)
    labels3 = (jax.random.uniform(k8, (N3, D3)) > 0.5).astype(jnp.float32)
    out3 = jax.block_until_ready(
        activation_loss(zero3, one3, labels3, target_block_bytes=16 * 1024))
    _check(out3, activation_loss_ref(zero3, one3, labels3), "t3")

    # Test 4: tiny odd shape (D=7, total not a 128 multiple) -> fallback layout.
    k9, k10, k11 = jax.random.split(jax.random.PRNGKey(3), 3)
    N4, D4 = 10, 7
    zero4 = jax.random.uniform(k9, (N4, D4), dtype=jnp.float32)
    one4 = jax.random.uniform(k10, (N4, D4), dtype=jnp.float32)
    labels4 = (jax.random.uniform(k11, (N4, D4)) > 0.5).astype(jnp.float32)
    out4 = jax.block_until_ready(activation_loss(zero4, one4, labels4))
    _check(out4, activation_loss_ref(zero4, one4, labels4), "t4")

    print("KERNEL_OK")
</pallas_src>

<mosaic_0001>
module attributes {stable_mosaic.version = 11 : i64} {
  func.func @_act_loss_kernel(%arg0: i32, %arg1: memref<8x128xf32, #tpu.memory_space<vmem>>, %arg2: memref<8x128xf32, #tpu.memory_space<vmem>>, %arg3: memref<8x128xf32, #tpu.memory_space<vmem>>, %arg4: memref<1x8x128xf32, #tpu.memory_space<vmem>>) attributes {dimension_semantics = [#tpu.dimension_semantics<parallel>], iteration_bounds = array<i64: 1>, scalar_prefetch = 0 : i64, scratch_operands = 0 : i64, tpu.core_type = #tpu.core_type<tc>, window_params = [{transform_indices = @transform_0, window_bounds = array<i64: 8, 128>}, {transform_indices = @transform_1, window_bounds = array<i64: 8, 128>}, {transform_indices = @transform_2, window_bounds = array<i64: 8, 128>}, {transform_indices = @transform_3, window_bounds = array<i64: 1, 8, 128>}]} {
    %c0 = arith.constant 0 : index
    %c0_0 = arith.constant 0 : index
    %0 = vector.load %arg3[%c0, %c0_0] : memref<8x128xf32, #tpu.memory_space<vmem>>, vector<8x128xf32>
    %c0_1 = arith.constant 0 : index
    %c0_2 = arith.constant 0 : index
    %1 = vector.load %arg2[%c0_1, %c0_2] : memref<8x128xf32, #tpu.memory_space<vmem>>, vector<8x128xf32>
    %c0_3 = arith.constant 0 : index
    %c0_4 = arith.constant 0 : index
    %2 = vector.load %arg1[%c0_3, %c0_4] : memref<8x128xf32, #tpu.memory_space<vmem>>, vector<8x128xf32>
    %3 = arith.subf %1, %0 : vector<8x128xf32>
    %4 = math.absf %3 : vector<8x128xf32>
    %cst = arith.constant 1.000000e+00 : f32
    %5 = vector.broadcast %cst : f32 to vector<8x128xf32>
    %6 = arith.subf %5, %0 : vector<8x128xf32>
    %7 = arith.subf %2, %6 : vector<8x128xf32>
    %8 = math.absf %7 : vector<8x128xf32>
    %9 = arith.addf %4, %8 : vector<8x128xf32>
    %10 = vector.shape_cast %9 : vector<8x128xf32> to vector<1x8x128xf32>
    %cst_5 = arith.constant dense<0.000000e+00> : vector<8x128xf32>
    %11 = vector.multi_reduction <add>, %10, %cst_5 [0] : vector<1x8x128xf32> to vector<8x128xf32>
    %12 = vector.shape_cast %11 : vector<8x128xf32> to vector<1x8x128xf32>
    %c0_6 = arith.constant 0 : index
    %c0_7 = arith.constant 0 : index
    %c0_8 = arith.constant 0 : index
    %13 = vector.load %arg4[%c0_6, %c0_7, %c0_8] : memref<1x8x128xf32, #tpu.memory_space<vmem>>, vector<1x8x128xf32>
    tpu.vector_store %arg4[%c0_6, %c0_7, %c0_8], %12 {strides = array<i32>} : memref<1x8x128xf32, #tpu.memory_space<vmem>>, vector<1x8x128xf32>,
    return
  }
  func.func @transform_0(%arg0: i32) -> (i32, i32) {
    %c0_i32 = arith.constant 0 : i32
    %c0_i32_0 = arith.constant 0 : i32
    return %arg0, %c0_i32 : i32, i32
  }
  func.func @transform_1(%arg0: i32) -> (i32, i32) {
    %c0_i32 = arith.constant 0 : i32
    %c0_i32_0 = arith.constant 0 : i32
    return %arg0, %c0_i32 : i32, i32
  }
  func.func @transform_2(%arg0: i32) -> (i32, i32) {
    %c0_i32 = arith.constant 0 : i32
    %c0_i32_0 = arith.constant 0 : i32
    return %arg0, %c0_i32 : i32, i32
  }
  func.func @transform_3(%arg0: i32) -> (i32, i32, i32) {
    %c0_i32 = arith.constant 0 : i32
    %c0_i32_0 = arith.constant 0 : i32
    %c0_i32_1 = arith.constant 0 : i32
    return %arg0, %c0_i32, %c0_i32_0 : i32, i32, i32
  }
}

</mosaic_0001>

<llo_original>
// kernel: tpu_custom_call.1
$region0: #{tpu_custom_call.1}
  #allocation0 [shape = 'u32[]', space=smem, size = 0x4, offset = 0x4, fixed_abs, tag = 'smem constant byte address 0x4 - core index']
  #allocation1 [shape = 'u32[144,128]{1,0:T(1,128)}', space=vmem, size = 0x12000, scoped, tag = 'internal scratch']
  %s0 = inlined_call_operand.hbm [shape: f32[8,128], index: 0, kind: input, shape index: {}]
  %s1 = inlined_call_operand.hbm [shape: f32[8,128], index: 1, kind: input, shape index: {}]
  %s2 = inlined_call_operand.hbm [shape: f32[8,128], index: 2, kind: input, shape index: {}]
  %s3 = inlined_call_operand.hbm [shape: f32[1,8,128], index: 3, kind: output, shape index: {}]
  %s4 = sld [smem:[#allocation0]]
  $region34: #{tpu_custom_call.1} parent=0
    _
  %s6 = ssub.s32 1, %s4
  %s7 = scalar_select 0, %s6, %s4
  $region1: #{tpu_custom_call.1} parent=0
    #allocation2 [shape = 'u8[4096]{0}', space=vmem, size = 0x1000, scoped, tag = 'input window, operand 0, single buffered']
    #allocation3 [shape = 's32[1]{0}', space=sflag, size = 0x4, scoped, tag = 'scoped memory for tpu_custom_call.1']
    #allocation4 [shape = 's32[1]{0}', space=sflag, size = 0x4, scoped, tag = 'scoped memory for tpu_custom_call.1']
    #allocation5 [shape = 'u8[4096]{0}', space=vmem, size = 0x1000, scoped, tag = 'input window, operand 1, single buffered']
    #allocation6 [shape = 's32[1]{0}', space=sflag, size = 0x4, scoped, tag = 'scoped memory for tpu_custom_call.1']
    #allocation7 [shape = 'u8[4096]{0}', space=vmem, size = 0x1000, scoped, tag = 'input window, operand 2, single buffered']
    #allocation8 [shape = 'u8[4096]{0}', space=vmem, size = 0x1000, scoped, tag = 'output window, operand 0, single buffered']
    %8 = vsyncpa [#allocation3], 0
    %9 = vsyncpa [#allocation6], 0
    %10 = vsyncpa [#allocation4], 0
    // Predicated region
    $region2: #{tpu_custom_call.1} parent=1 // pred_check
      _
    $region3: #{tpu_custom_call.1} parent=1 // pred_check_branch
      %12 = sbr.rel (0) target = $region5
    $region4: #{tpu_custom_call.1} parent=1 // pred_region
      %s14 = ssub.s32 128, 128
      %15 = vsyncadd [#allocation3], %s14
      %s17 = sshll.u32 [#allocation2], 4
      %s18 = int_to_ptr.vmem [resolvable:$true] %s17
      %20 = dma.hbm_to_vmem [thread:$0]  %s0, 128, %s18, [#allocation3]
    $region5: #{tpu_custom_call.1} parent=1 // pred_fallthru
      _
    // Predicated region
    $region6: #{tpu_custom_call.1} parent=1 // pred_check
      _
    $region7: #{tpu_custom_call.1} parent=1 // pred_check_branch
      %22 = sbr.rel (0) target = $region9
    $region8: #{tpu_custom_call.1} parent=1 // pred_region
      %s24 = ssub.s32 128, 128
      %25 = vsyncadd [#allocation6], %s24
      %s27 = sshll.u32 [#allocation5], 4
      %s28 = int_to_ptr.vmem [resolvable:$true] %s27
      %30 = dma.hbm_to_vmem [thread:$0]  %s1, 128, %s28, [#allocation6]
    $region9: #{tpu_custom_call.1} parent=1 // pred_fallthru
      _
    // Predicated region
    $region10: #{tpu_custom_call.1} parent=1 // pred_check
      _
    $region11: #{tpu_custom_call.1} parent=1 // pred_check_branch
      %32 = sbr.rel (0) target = $region13
    $region12: #{tpu_custom_call.1} parent=1 // pred_region
      %s34 = ssub.s32 128, 128
      %35 = vsyncadd [#allocation6], %s34
      %s37 = sshll.u32 [#allocation7], 4
      %s38 = int_to_ptr.vmem [resolvable:$true] %s37
      %40 = dma.hbm_to_vmem [thread:$0]  %s2, 128, %s38, [#allocation6]
    $region13: #{tpu_custom_call.1} parent=1 // pred_fallthru
      _
    // Predicated region
    $region14: #{tpu_custom_call.1} parent=1 // pred_check
      _
    $region15: #{tpu_custom_call.1} parent=1 // pred_check_branch
      %42 = sbr.rel (0) target = $region17
    $region16: #{tpu_custom_call.1} parent=1 // pred_region
      %43 = dma.done [#allocation3], 128
    $region17: #{tpu_custom_call.1} parent=1 // pred_fallthru
      _
    // Predicated region
    $region18: #{tpu_custom_call.1} parent=1 // pred_check
      _
    $region19: #{tpu_custom_call.1} parent=1 // pred_check_branch
      %45 = sbr.rel (0) target = $region21
    $region20: #{tpu_custom_call.1} parent=1 // pred_region
      %46 = dma.done [#allocation6], 128
    $region21: #{tpu_custom_call.1} parent=1 // pred_fallthru
      _
    // Predicated region
    $region22: #{tpu_custom_call.1} parent=1 // pred_check
      _
    $region23: #{tpu_custom_call.1} parent=1 // pred_check_branch
      %48 = sbr.rel (0) target = $region25
    $region24: #{tpu_custom_call.1} parent=1 // pred_region
      %49 = dma.done [#allocation6], 128
    $region25: #{tpu_custom_call.1} parent=1 // pred_fallthru
      _
    %v50 = vld [vmem:[#allocation7] sm:$0xff]
    %v51 = vld [vmem:[#allocation5] sm:$0xff]
    %v52 = vld [vmem:[#allocation2] sm:$0xff]
    %v53 = vsub.f32 %v51, %v50
    %v54 = vand.u32 2147483647, %v53
    %v55 = vsub.f32 1.0, %v50
    %v56 = vsub.f32 %v52, %v55
    %v57 = vand.u32 2147483647, %v56
    %v58 = vadd.f32 %v54, %v57
    %v59 = vadd.f32 %v58, 0.0
    %60 = vst [vmem:[#allocation8] sm:$0xff] %v59
    // Predicated region
    $region26: #{tpu_custom_call.1} parent=1 // pred_check
      _
    $region27: #{tpu_custom_call.1} parent=1 // pred_check_branch
      %62 = sbr.rel (0) target = $region29
    $region28: #{tpu_custom_call.1} parent=1 // pred_region
      %s64 = ssub.s32 128, 128
      %65 = vsyncadd [#allocation4], %s64
      %s67 = sshll.u32 [#allocation8], 4
      %s68 = int_to_ptr.vmem [resolvable:$true] %s67
      %70 = dma.vmem_to_hbm [thread:$0]  %s68, 128, %s3, [#allocation4]
    $region29: #{tpu_custom_call.1} parent=1 // pred_fallthru
      _
    // Predicated region
    $region30: #{tpu_custom_call.1} parent=1 // pred_check
      _
    $region31: #{tpu_custom_call.1} parent=1 // pred_check_branch
      %72 = sbr.rel (0) target = $region33
    $region32: #{tpu_custom_call.1} parent=1 // pred_region
      %73 = dma.done [#allocation4], 128
    $region33: #{tpu_custom_call.1} parent=1 // pred_fallthru
      _
    %74 = vsyncpa [#allocation3], 1
    %75 = vsyncpa [#allocation6], 1
    %76 = vsyncpa [#allocation4], 1

</llo_original>
